<compile_context>
chip_gen: v5e
topology: v5e:2x2
jax: 0.10.0
libtpu: 0.0.40
codegen_flags: <defaults>
</compile_context>

<pallas_src>
import functools

import jax
import jax.numpy as jnp
from jax.experimental import pallas as pl
from jax.experimental.pallas import tpu as pltpu

LANE = 128
VMEM_LIMIT_BYTES = 32 * 1024 * 1024      # matches v6e/v7x scoped default; fine on v5e
VMEM_STREAM_BUDGET = 24 * 1024 * 1024    # budget for params + double-buffered x/out tiles


def _round_up(x, m):
    return ((x + m - 1) // m) * m


def autoencoder_kernel(
    x_ref,
    w1_ref, b1_ref,    # num_input -> h1p        (ReLU)
    w2_ref, b2_ref,    # h1p       -> h2p        (ReLU)
    w34_ref, b34_ref,  # h2p       -> h2p        (fused enc-L3 + dec-L4, ReLU)
    w5_ref, b5_ref,    # h2p       -> h1p        (ReLU)
    w6_ref, b6_ref,    # h1p       -> num_input  (Tanh)
    o_ref,
):
    cdt = w1_ref.dtype            # dot-operand dtype (bf16 by default, or f32)
    # x streams from HBM in its original dtype; cast in-kernel (no wrapper pass).
    x = x_ref[...].astype(cdt)

    def dense_relu(h, w_ref, b_ref):
        y = jnp.dot(h, w_ref[...], preferred_element_type=jnp.float32)
        y = jnp.maximum(y + b_ref[...], 0.0)      # bias add + ReLU stay f32
        return y.astype(cdt)

    h = dense_relu(x, w1_ref, b1_ref)             # encoder Linear1 + ReLU
    h = dense_relu(h, w2_ref, b2_ref)             # encoder Linear2 + ReLU
    h = dense_relu(h, w34_ref, b34_ref)           # fused encoder L3 + decoder L4 + ReLU
    h = dense_relu(h, w5_ref, b5_ref)             # decoder Linear5 + ReLU
    y = jnp.dot(h, w6_ref[...], preferred_element_type=jnp.float32) + b6_ref[...]
    o_ref[...] = jnp.tanh(y).astype(o_ref.dtype)  # decoder Linear6 + Tanh


def prepare_params(params, compute_dtype):
    """Fuse the bottleneck pair and zero-pad hidden widths to 128 lanes (exact:
    relu(0) = 0 and the padded K rows of the next weight are zero)."""
    w1, b1, w2, b2, w3, b3, w4, b4, w5, b5, w6, b6 = params
    # relu((h@w3 + b3) @ w4 + b4) == relu(h @ (w3@w4) + (b3@w4 + b4))
    w34 = w3 @ w4
    b34 = b3 @ w4 + b4

    ws = [w1, w2, w34, w5, w6]
    bs = [b1, b2, b34, b5, b6]

    n_in = w1.shape[0]
    n_out = w6.shape[1]
    dims = [n_in] + [_round_up(w.shape[1], LANE) for w in ws[:-1]] + [n_out]

    fused = []
    for i, (w, b) in enumerate(zip(ws, bs)):
        wp = jnp.pad(w, ((0, dims[i] - w.shape[0]), (0, dims[i + 1] - w.shape[1])))
        bp = jnp.pad(b, ((0, 0), (0, dims[i + 1] - b.shape[1])))
        fused.append(wp.astype(compute_dtype))    # dot operands in compute dtype
        fused.append(bp.astype(jnp.float32))      # bias add stays f32
    return fused, dims


def _choose_batch_tile(batch, block_batch, num_input, in_bytes, out_bytes, param_bytes):
    """Largest 128-multiple batch tile fitting the VMEM budget; grid >= 2 when possible."""
    per_row = 2 * num_input * (in_bytes + out_bytes)          # x + out, double-buffered
    tb_vmem = max(LANE, ((VMEM_STREAM_BUDGET - param_bytes) // per_row) // LANE * LANE)
    batch_p = _round_up(batch, LANE)
    tb = min(_round_up(block_batch, LANE), tb_vmem, batch_p)
    # v7x has 2 TensorCores: keep at least 2 grid steps whenever the batch allows it
    # so dimension_semantics=("parallel",) has something to shard (free on v5e/v6e).
    if batch_p > LANE and batch_p // tb < 2:
        tb = _round_up((batch_p + 1) // 2, LANE)
    return tb


@functools.partial(jax.jit, static_argnames=("compute_dtype", "out_dtype", "block_batch"))
def autoencoder_forward(x, params, *, compute_dtype=jnp.bfloat16, out_dtype=None,
                        block_batch=1024):
    """x: (batch, num_input). params: flat [w1, b1, ..., w6, b6] with weights stored
    (in_features, out_features).  compute_dtype=bf16 is MXU-native on v5e/v6e/v7x;
    pass jnp.float32 for a bit-tighter match to the PyTorch reference."""
    batch, num_input = x.shape
    out_dtype = jnp.dtype(out_dtype if out_dtype is not None else x.dtype)
    fused, dims = prepare_params(params, compute_dtype)
    param_bytes = sum(int(p.size) * p.dtype.itemsize for p in fused)

    tb = _choose_batch_tile(batch, block_batch, num_input,
                            x.dtype.itemsize, out_dtype.itemsize, param_bytes)
    batch_p = _round_up(batch, tb)
    # No wrapper-side cast of x; only the (rare) batch tail is zero-padded.
    x_p = x if batch_p == batch else jnp.pad(x, ((0, batch_p - batch), (0, 0)))
    grid = (batch_p // tb,)

    x_spec = pl.BlockSpec((tb, num_input), lambda i: (i, 0))
    out_spec = pl.BlockSpec((tb, num_input), lambda i: (i, 0))
    # Constant block index across the grid -> params fetched once, VMEM-resident.
    param_specs = [pl.BlockSpec(p.shape, lambda i: (0, 0)) for p in fused]

    flops_per_row = 2 * sum(dims[i] * dims[i + 1] for i in range(len(dims) - 1))
    cost = pl.CostEstimate(
        flops=int(batch * flops_per_row),
        transcendentals=int(batch * num_input),
        bytes_accessed=int(batch * num_input * (x.dtype.itemsize + out_dtype.itemsize)
                           + param_bytes),
    )

    out = pl.pallas_call(
        autoencoder_kernel,
        out_shape=jax.ShapeDtypeStruct((batch_p, num_input), out_dtype),
        grid=grid,
        in_specs=[x_spec] + param_specs,
        out_specs=out_spec,
        compiler_params=pltpu.CompilerParams(
            dimension_semantics=("parallel",),
            vmem_limit_bytes=VMEM_LIMIT_BYTES,
        ),
        cost_estimate=cost,
    )(x_p, *fused)

    return out[:batch]


def init_linear_params(key, fan_in, fan_out):
    """Deterministic PyTorch-style init: U(-1/sqrt(fan_in), 1/sqrt(fan_in))."""
    kw, kb = jax.random.split(key)
    bound = 1.0 / jnp.sqrt(jnp.float32(fan_in))
    w = jax.random.uniform(kw, (fan_in, fan_out), jnp.float32, -bound, bound)
    b = jax.random.uniform(kb, (1, fan_out), jnp.float32, -bound, bound)  # lane-major 2D
    return w, b


def reference_forward(x, params):
    w1, b1, w2, b2, w3, b3, w4, b4, w5, b5, w6, b6 = params
    h = jnp.maximum(x @ w1 + b1, 0.0)
    h = jnp.maximum(h @ w2 + b2, 0.0)
    z = h @ w3 + b3
    h = jnp.maximum(z @ w4 + b4, 0.0)
    h = jnp.maximum(h @ w5 + b5, 0.0)
    return jnp.tanh(h @ w6 + b6)


if __name__ == "__main__":
    # Shapes consistent with the module: num_input features, two hidden widths and a
    # bottleneck feature dim.  batch=256 exercises the grid (auto-tiles to 2 x 128 rows
    # so both v7x TensorCores get a step).
    batch = 256
    num_input = 128
    num_hidden1 = 64
    num_hidden2 = 32
    num_feature = 16

    key = jax.random.PRNGKey(0)
    keys = jax.random.split(key, 7)

    # Input mimics preprocessing.scale(rna): standardized features.
    # TODO(synk): preprocessing.scale / data loading is outside the nn.Module; not a kernel op.
    x = jax.random.normal(keys[0], (batch, num_input), jnp.float32)

    layer_dims = [
        (num_input, num_hidden1),
        (num_hidden1, num_hidden2),
        (num_hidden2, num_feature),
        (num_feature, num_hidden2),
        (num_hidden2, num_hidden1),
        (num_hidden1, num_input),
    ]
    params = []
    for k, (fi, fo) in zip(keys[1:], layer_dims):
        w, b = init_linear_params(k, fi, fo)
        params.extend([w, b])

    ref = reference_forward(x, params)

    # Default path: bf16 dot operands (MXU-native on every generation), f32 output.
    out_default = jax.block_until_ready(autoencoder_forward(x, params))
    assert out_default.shape == (batch, num_input) and out_default.dtype == jnp.float32
    assert jnp.allclose(out_default, ref, atol=3e-2, rtol=3e-2)

    # f32 dot-operand path: matches the reference up to rounding of the w3@w4 fusion.
    out_f32 = jax.block_until_ready(
        autoencoder_forward(x, params, compute_dtype=jnp.float32))
    assert jnp.allclose(out_f32, ref, atol=1e-4, rtol=1e-4)

    # bf16 output path: halves the HBM writeback when downstream tolerates bf16.
    out_lo = jax.block_until_ready(
        autoencoder_forward(x, params, out_dtype=jnp.bfloat16))
    assert out_lo.dtype == jnp.bfloat16
    assert jnp.allclose(out_lo.astype(jnp.float32), ref, atol=5e-2, rtol=5e-2)

    print("KERNEL_OK")
</pallas_src>

<mosaic_0001>
module attributes {stable_mosaic.version = 11 : i64} {
  func.func @autoencoder_kernel(%arg0: i32, %arg1: memref<128x128xf32, #tpu.memory_space<vmem>>, %arg2: memref<128x128xbf16, #tpu.memory_space<vmem>>, %arg3: memref<1x128xf32, #tpu.memory_space<vmem>>, %arg4: memref<128x128xbf16, #tpu.memory_space<vmem>>, %arg5: memref<1x128xf32, #tpu.memory_space<vmem>>, %arg6: memref<128x128xbf16, #tpu.memory_space<vmem>>, %arg7: memref<1x128xf32, #tpu.memory_space<vmem>>, %arg8: memref<128x128xbf16, #tpu.memory_space<vmem>>, %arg9: memref<1x128xf32, #tpu.memory_space<vmem>>, %arg10: memref<128x128xbf16, #tpu.memory_space<vmem>>, %arg11: memref<1x128xf32, #tpu.memory_space<vmem>>, %arg12: memref<128x128xf32, #tpu.memory_space<vmem>>) attributes {dimension_semantics = [#tpu.dimension_semantics<parallel>], iteration_bounds = array<i64: 2>, scalar_prefetch = 0 : i64, scratch_operands = 0 : i64, tpu.core_type = #tpu.core_type<tc>, window_params = [{transform_indices = @transform_0, window_bounds = array<i64: 128, 128>}, {pipeline_mode = #tpu.pipeline_mode<synchronous>, transform_indices = @transform_1, window_bounds = array<i64: 128, 128>}, {pipeline_mode = #tpu.pipeline_mode<synchronous>, transform_indices = @transform_2, window_bounds = array<i64: 1, 128>}, {pipeline_mode = #tpu.pipeline_mode<synchronous>, transform_indices = @transform_3, window_bounds = array<i64: 128, 128>}, {pipeline_mode = #tpu.pipeline_mode<synchronous>, transform_indices = @transform_4, window_bounds = array<i64: 1, 128>}, {pipeline_mode = #tpu.pipeline_mode<synchronous>, transform_indices = @transform_5, window_bounds = array<i64: 128, 128>}, {pipeline_mode = #tpu.pipeline_mode<synchronous>, transform_indices = @transform_6, window_bounds = array<i64: 1, 128>}, {pipeline_mode = #tpu.pipeline_mode<synchronous>, transform_indices = @transform_7, window_bounds = array<i64: 128, 128>}, {pipeline_mode = #tpu.pipeline_mode<synchronous>, transform_indices = @transform_8, window_bounds = array<i64: 1, 128>}, {pipeline_mode = #tpu.pipeline_mode<synchronous>, transform_indices = @transform_9, window_bounds = array<i64: 128, 128>}, {pipeline_mode = #tpu.pipeline_mode<synchronous>, transform_indices = @transform_10, window_bounds = array<i64: 1, 128>}, {transform_indices = @transform_11, window_bounds = array<i64: 128, 128>}]} {
    %c0 = arith.constant 0 : index
    %c0_0 = arith.constant 0 : index
    %0 = vector.load %arg1[%c0, %c0_0] : memref<128x128xf32, #tpu.memory_space<vmem>>, vector<128x128xf32>
    %1 = arith.truncf %0 : vector<128x128xf32> to vector<128x128xbf16>
    %c0_1 = arith.constant 0 : index
    %c0_2 = arith.constant 0 : index
    %2 = vector.load %arg2[%c0_1, %c0_2] : memref<128x128xbf16, #tpu.memory_space<vmem>>, vector<128x128xbf16>
    %cst = arith.constant dense<0.000000e+00> : vector<128x128xf32>
    %3 = tpu.matmul %1, %2, %cst {dimension_numbers = #tpu.dot_dimension_numbers<[1], [0], [0], [1], [0, 0, 1, 1], [], []>} : vector<128x128xbf16>, vector<128x128xbf16>, vector<128x128xf32> -> vector<128x128xf32>
    %c0_3 = arith.constant 0 : index
    %c0_4 = arith.constant 0 : index
    %4 = vector.load %arg3[%c0_3, %c0_4] : memref<1x128xf32, #tpu.memory_space<vmem>>, vector<1x128xf32>
    %5 = vector.broadcast %4 : vector<1x128xf32> to vector<128x128xf32>
    %6 = arith.addf %3, %5 : vector<128x128xf32>
    %cst_5 = arith.constant 0.000000e+00 : f32
    %7 = vector.broadcast %cst_5 : f32 to vector<128x128xf32>
    %8 = arith.maximumf %6, %7 : vector<128x128xf32>
    %9 = arith.truncf %8 : vector<128x128xf32> to vector<128x128xbf16>
    %c0_6 = arith.constant 0 : index
    %c0_7 = arith.constant 0 : index
    %10 = vector.load %arg4[%c0_6, %c0_7] : memref<128x128xbf16, #tpu.memory_space<vmem>>, vector<128x128xbf16>
    %cst_8 = arith.constant dense<0.000000e+00> : vector<128x128xf32>
    %11 = tpu.matmul %9, %10, %cst_8 {dimension_numbers = #tpu.dot_dimension_numbers<[1], [0], [0], [1], [0, 0, 1, 1], [], []>} : vector<128x128xbf16>, vector<128x128xbf16>, vector<128x128xf32> -> vector<128x128xf32>
    %c0_9 = arith.constant 0 : index
    %c0_10 = arith.constant 0 : index
    %12 = vector.load %arg5[%c0_9, %c0_10] : memref<1x128xf32, #tpu.memory_space<vmem>>, vector<1x128xf32>
    %13 = vector.broadcast %12 : vector<1x128xf32> to vector<128x128xf32>
    %14 = arith.addf %11, %13 : vector<128x128xf32>
    %cst_11 = arith.constant 0.000000e+00 : f32
    %15 = vector.broadcast %cst_11 : f32 to vector<128x128xf32>
    %16 = arith.maximumf %14, %15 : vector<128x128xf32>
    %17 = arith.truncf %16 : vector<128x128xf32> to vector<128x128xbf16>
    %c0_12 = arith.constant 0 : index
    %c0_13 = arith.constant 0 : index
    %18 = vector.load %arg6[%c0_12, %c0_13] : memref<128x128xbf16, #tpu.memory_space<vmem>>, vector<128x128xbf16>
    %cst_14 = arith.constant dense<0.000000e+00> : vector<128x128xf32>
    %19 = tpu.matmul %17, %18, %cst_14 {dimension_numbers = #tpu.dot_dimension_numbers<[1], [0], [0], [1], [0, 0, 1, 1], [], []>} : vector<128x128xbf16>, vector<128x128xbf16>, vector<128x128xf32> -> vector<128x128xf32>
    %c0_15 = arith.constant 0 : index
    %c0_16 = arith.constant 0 : index
    %20 = vector.load %arg7[%c0_15, %c0_16] : memref<1x128xf32, #tpu.memory_space<vmem>>, vector<1x128xf32>
    %21 = vector.broadcast %20 : vector<1x128xf32> to vector<128x128xf32>
    %22 = arith.addf %19, %21 : vector<128x128xf32>
    %cst_17 = arith.constant 0.000000e+00 : f32
    %23 = vector.broadcast %cst_17 : f32 to vector<128x128xf32>
    %24 = arith.maximumf %22, %23 : vector<128x128xf32>
    %25 = arith.truncf %24 : vector<128x128xf32> to vector<128x128xbf16>
    %c0_18 = arith.constant 0 : index
    %c0_19 = arith.constant 0 : index
    %26 = vector.load %arg8[%c0_18, %c0_19] : memref<128x128xbf16, #tpu.memory_space<vmem>>, vector<128x128xbf16>
    %cst_20 = arith.constant dense<0.000000e+00> : vector<128x128xf32>
    %27 = tpu.matmul %25, %26, %cst_20 {dimension_numbers = #tpu.dot_dimension_numbers<[1], [0], [0], [1], [0, 0, 1, 1], [], []>} : vector<128x128xbf16>, vector<128x128xbf16>, vector<128x128xf32> -> vector<128x128xf32>
    %c0_21 = arith.constant 0 : index
    %c0_22 = arith.constant 0 : index
    %28 = vector.load %arg9[%c0_21, %c0_22] : memref<1x128xf32, #tpu.memory_space<vmem>>, vector<1x128xf32>
    %29 = vector.broadcast %28 : vector<1x128xf32> to vector<128x128xf32>
    %30 = arith.addf %27, %29 : vector<128x128xf32>
    %cst_23 = arith.constant 0.000000e+00 : f32
    %31 = vector.broadcast %cst_23 : f32 to vector<128x128xf32>
    %32 = arith.maximumf %30, %31 : vector<128x128xf32>
    %33 = arith.truncf %32 : vector<128x128xf32> to vector<128x128xbf16>
    %c0_24 = arith.constant 0 : index
    %c0_25 = arith.constant 0 : index
    %34 = vector.load %arg10[%c0_24, %c0_25] : memref<128x128xbf16, #tpu.memory_space<vmem>>, vector<128x128xbf16>
    %cst_26 = arith.constant dense<0.000000e+00> : vector<128x128xf32>
    %35 = tpu.matmul %33, %34, %cst_26 {dimension_numbers = #tpu.dot_dimension_numbers<[1], [0], [0], [1], [0, 0, 1, 1], [], []>} : vector<128x128xbf16>, vector<128x128xbf16>, vector<128x128xf32> -> vector<128x128xf32>
    %c0_27 = arith.constant 0 : index
    %c0_28 = arith.constant 0 : index
    %36 = vector.load %arg11[%c0_27, %c0_28] : memref<1x128xf32, #tpu.memory_space<vmem>>, vector<1x128xf32>
    %37 = vector.broadcast %36 : vector<1x128xf32> to vector<128x128xf32>
    %38 = arith.addf %35, %37 : vector<128x128xf32>
    %39 = math.tanh %38 : vector<128x128xf32>
    %c0_29 = arith.constant 0 : index
    %c0_30 = arith.constant 0 : index
    %40 = vector.load %arg12[%c0_29, %c0_30] : memref<128x128xf32, #tpu.memory_space<vmem>>, vector<128x128xf32>
    tpu.vector_store %arg12[%c0_29, %c0_30], %39 {strides = array<i32>} : memref<128x128xf32, #tpu.memory_space<vmem>>, vector<128x128xf32>,
    return
  }
  func.func @transform_0(%arg0: i32) -> (i32, i32) {
    %c0_i32 = arith.constant 0 : i32
    %c0_i32_0 = arith.constant 0 : i32
    return %arg0, %c0_i32 : i32, i32
  }
  func.func @transform_1(%arg0: i32) -> (i32, i32) {
    %c0_i32 = arith.constant 0 : i32
    %c0_i32_0 = arith.constant 0 : i32
    %c0_i32_1 = arith.constant 0 : i32
    return %c0_i32, %c0_i32_0 : i32, i32
  }
  func.func @transform_2(%arg0: i32) -> (i32, i32) {
    %c0_i32 = arith.constant 0 : i32
    %c0_i32_0 = arith.constant 0 : i32
    %c0_i32_1 = arith.constant 0 : i32
    return %c0_i32, %c0_i32_0 : i32, i32
  }
  func.func @transform_3(%arg0: i32) -> (i32, i32) {
    %c0_i32 = arith.constant 0 : i32
    %c0_i32_0 = arith.constant 0 : i32
    %c0_i32_1 = arith.constant 0 : i32
    return %c0_i32, %c0_i32_0 : i32, i32
  }
  func.func @transform_4(%arg0: i32) -> (i32, i32) {
    %c0_i32 = arith.constant 0 : i32
    %c0_i32_0 = arith.constant 0 : i32
    %c0_i32_1 = arith.constant 0 : i32
    return %c0_i32, %c0_i32_0 : i32, i32
  }
  func.func @transform_5(%arg0: i32) -> (i32, i32) {
    %c0_i32 = arith.constant 0 : i32
    %c0_i32_0 = arith.constant 0 : i32
    %c0_i32_1 = arith.constant 0 : i32
    return %c0_i32, %c0_i32_0 : i32, i32
  }
  func.func @transform_6(%arg0: i32) -> (i32, i32) {
    %c0_i32 = arith.constant 0 : i32
    %c0_i32_0 = arith.constant 0 : i32
    %c0_i32_1 = arith.constant 0 : i32
    return %c0_i32, %c0_i32_0 : i32, i32
  }
  func.func @transform_7(%arg0: i32) -> (i32, i32) {
    %c0_i32 = arith.constant 0 : i32
    %c0_i32_0 = arith.constant 0 : i32
    %c0_i32_1 = arith.constant 0 : i32
    return %c0_i32, %c0_i32_0 : i32, i32
  }
  func.func @transform_8(%arg0: i32) -> (i32, i32) {
    %c0_i32 = arith.constant 0 : i32
    %c0_i32_0 = arith.constant 0 : i32
    %c0_i32_1 = arith.constant 0 : i32
    return %c0_i32, %c0_i32_0 : i32, i32
  }
  func.func @transform_9(%arg0: i32) -> (i32, i32) {
    %c0_i32 = arith.constant 0 : i32
    %c0_i32_0 = arith.constant 0 : i32
    %c0_i32_1 = arith.constant 0 : i32
    return %c0_i32, %c0_i32_0 : i32, i32
  }
  func.func @transform_10(%arg0: i32) -> (i32, i32) {
    %c0_i32 = arith.constant 0 : i32
    %c0_i32_0 = arith.constant 0 : i32
    %c0_i32_1 = arith.constant 0 : i32
    return %c0_i32, %c0_i32_0 : i32, i32
  }
  func.func @transform_11(%arg0: i32) -> (i32, i32) {
    %c0_i32 = arith.constant 0 : i32
    %c0_i32_0 = arith.constant 0 : i32
    return %arg0, %c0_i32 : i32, i32
  }
}

</mosaic_0001>

<llo_original>
// kernel: autoencoder_forward.1
$region0: #{autoencoder_forward.1}
  #allocation0 [shape = 'u32[]', space=smem, size = 0x4, offset = 0x4, fixed_abs, tag = 'smem constant byte address 0x4 - core index']
  #allocation1 [shape = 'u32[72,128]{1,0:T(1,128)}', space=vmem, size = 0x9000, scoped, tag = 'internal scratch']
  %s0 = inlined_call_operand.vmem [shape: f32[256,128], index: 0, kind: input, shape index: {}]
  %s1 = inlined_call_operand.vmem [shape: bf16[128,128], index: 1, kind: input, shape index: {}]
  %s2 = inlined_call_operand.vmem [shape: f32[1,128], index: 2, kind: input, shape index: {}]
  %s3 = inlined_call_operand.vmem [shape: bf16[128,128], index: 3, kind: input, shape index: {}]
  %s4 = inlined_call_operand.vmem [shape: f32[1,128], index: 4, kind: input, shape index: {}]
  %s5 = inlined_call_operand.vmem [shape: bf16[128,128], index: 5, kind: input, shape index: {}]
  %s6 = inlined_call_operand.vmem [shape: f32[1,128], index: 6, kind: input, shape index: {}]
  %s7 = inlined_call_operand.vmem [shape: bf16[128,128], index: 7, kind: input, shape index: {}]
  %s8 = inlined_call_operand.vmem [shape: f32[1,128], index: 8, kind: input, shape index: {}]
  %s9 = inlined_call_operand.vmem [shape: bf16[128,128], index: 9, kind: input, shape index: {}]
  %s10 = inlined_call_operand.vmem [shape: f32[1,128], index: 10, kind: input, shape index: {}]
  %s11 = inlined_call_operand.hbm [shape: f32[256,128], index: 11, kind: output, shape index: {}]
  %s12 = sld [smem:[#allocation0]]
  $region77: #{autoencoder_forward.1} parent=0
    _
  %s14 = ssub.s32 1, %s12
  %s15 = scalar_select 0, %s14, %s12
  $region1: #{autoencoder_forward.1} parent=0
    #allocation2 [shape = 'u8[131072]{0}', space=vmem, size = 0x20000, scoped, tag = 'output window, operand 0']
    #allocation3 [shape = 's32[2]{0}', space=sflag, size = 0x8, scoped, tag = 'scoped memory for autoencoder_forward.1']
    %16 = vsyncpa [#allocation3], 0
    %s17 = scalar_lea.sflag [#allocation3], 1
    %18 = vsyncpa %s17, 0
    loop: start=0, step=1, limit=4
    $region2: #{autoencoder_forward.1} parent=1 // loop_pre_header
      _
    $region3: #{autoencoder_forward.1} parent=1 // loop_header
      %s20 = sphi 0, %s24
      %p21 = scmp.ge.s32.totalorder %s20, 4
      %s30 = sphi 0, %s32
      %s33 = sphi 0, %s30
      %s34 = sphi 0, %s33
      %s50 = sphi 0, %s34
      %s54 = sphi 0, %s54
      %s56 = sphi 0, %s54
      %s57 = sphi 0, %s56
      %s71 = sphi 0, %s57
      %s75 = sphi 0, %s75
      %s77 = sphi 0, %s75
      %s78 = sphi 0, %s77
      %s92 = sphi 0, %s78
      %s96 = sphi 0, %s96
      %s98 = sphi 0, %s96
      %s99 = sphi 0, %s98
      %s113 = sphi 0, %s99
      %s117 = sphi 0, %s117
      %s119 = sphi 0, %s117
      %s120 = sphi 0, %s119
      %s134 = sphi 0, %s120
      %s138 = sphi 0, %s138
      %s140 = sphi 0, %s138
      %s141 = sphi 0, %s140
      %s155 = sphi 0, %s141
      %s159 = sphi 0, %s159
      %s161 = sphi 0, %s159
      %s162 = sphi 0, %s161
      %s176 = sphi 0, %s162
      %s180 = sphi 0, %s180
      %s182 = sphi 0, %s180
      %s183 = sphi 0, %s182
      %s197 = sphi 0, %s183
      %s201 = sphi 0, %s201
      %s203 = sphi 0, %s201
      %s204 = sphi 0, %s203
      %s218 = sphi 0, %s204
      %s222 = sphi 0, %s222
      %s224 = sphi 0, %s222
      %s225 = sphi 0, %s224
      %s239 = sphi 0, %s225
      %s243 = sphi 0, %s243
      %s245 = sphi 0, %s243
      %s246 = sphi 0, %s245
      %s260 = sphi 0, %s246
      %s266 = sphi 0, %s268
      %s269 = sphi 0, %s266
      %s270 = sphi 0, %s269
      %s286 = sphi 0, %s270
    $region4: #{autoencoder_forward.1} parent=1 // loop_header_branch
      %23 = sbr.rel (%p21) target = $region8
    $region5: #{autoencoder_forward.1} parent=1 // loop_body
      %s25 = ssub.s32 %s20, 1
      %s26 = ssub.s32 %s20, 2
      %s27 = sadd.s32 %s20, 1
      %s28 = ssub.s32 %s20, %s27
      %p29 = scmp.eq.s32.totalorder %s28, 0
      %s31 = sadd.s32 %s30, 1
      %s32 = scalar_select %p29, %s30, %s31
      %p35 = pneg %p29
      %p36 = scmp.eq.s32.totalorder %s20, 1
      %p37 = por %p35, %p36
      %p38 = scmp.ne.s32.totalorder %s30, %s33
      %p39 = scmp.eq.s32.totalorder %s20, 0
      %p40 = por %p38, %p39
      %p41 = scmp.ne.s32.totalorder %s30, %s33
      %p42 = scmp.eq.s32.totalorder %s25, 1
      %p43 = por %p41, %p42
      %p44 = scmp.ne.s32.totalorder %s33, %s34
      %p45 = scmp.eq.s32.totalorder %s25, 0
      %p46 = por %p44, %p45
      %p47 = scmp.ne.s32.totalorder %s33, %s34
      %p48 = scmp.eq.s32.totalorder %s26, 1
      %p49 = por %p47, %p48
      %p51 = scmp.ne.s32.totalorder %s34, %s50
      %p52 = scmp.eq.s32.totalorder %s26, 0
      %p53 = por %p51, %p52
      %s55 = sadd.s32 %s54, 1
      %p58 = scmp.eq.s32.totalorder %s20, 1
      %p59 = scmp.ne.s32.totalorder %s54, %s56
      %p60 = scmp.eq.s32.totalorder %s20, 0
      %p61 = por %p59, %p60
      %p62 = scmp.ne.s32.totalorder %s54, %s56
      %p63 = scmp.eq.s32.totalorder %s25, 1
      %p64 = por %p62, %p63
      %p65 = scmp.ne.s32.totalorder %s56, %s57
      %p66 = scmp.eq.s32.totalorder %s25, 0
      %p67 = por %p65, %p66
      %p68 = scmp.ne.s32.totalorder %s56, %s57
      %p69 = scmp.eq.s32.totalorder %s26, 1
      %p70 = por %p68, %p69
      %p72 = scmp.ne.s32.totalorder %s57, %s71
      %p73 = scmp.eq.s32.totalorder %s26, 0
      %p74 = por %p72, %p73
      %s76 = sadd.s32 %s75, 1
      %p79 = scmp.eq.s32.totalorder %s20, 1
      %p80 = scmp.ne.s32.totalorder %s75, %s77
      %p81 = scmp.eq.s32.totalorder %s20, 0
      %p82 = por %p80, %p81
      %p83 = scmp.ne.s32.totalorder %s75, %s77
      %p84 = scmp.eq.s32.totalorder %s25, 1
      %p85 = por %p83, %p84
      %p86 = scmp.ne.s32.totalorder %s77, %s78
      %p87 = scmp.eq.s32.totalorder %s25, 0
      %p88 = por %p86, %p87
      %p89 = scmp.ne.s32.totalorder %s77, %s78
      %p90 = scmp.eq.s32.totalorder %s26, 1
      %p91 = por %p89, %p90
      %p93 = scmp.ne.s32.totalorder %s78, %s92
      %p94 = scmp.eq.s32.totalorder %s26, 0
      %p95 = por %p93, %p94
      %s97 = sadd.s32 %s96, 1
      %p100 = scmp.eq.s32.totalorder %s20, 1
      %p101 = scmp.ne.s32.totalorder %s96, %s98
      %p102 = scmp.eq.s32.totalorder %s20, 0
      %p103 = por %p101, %p102
      %p104 = scmp.ne.s32.totalorder %s96, %s98
      %p105 = scmp.eq.s32.totalorder %s25, 1
      %p106 = por %p104, %p105
      %p107 = scmp.ne.s32.totalorder %s98, %s99
      %p108 = scmp.eq.s32.totalorder %s25, 0
      %p109 = por %p107, %p108
      %p110 = scmp.ne.s32.totalorder %s98, %s99
      %p111 = scmp.eq.s32.totalorder %s26, 1
      %p112 = por %p110, %p111
      %p114 = scmp.ne.s32.totalorder %s99, %s113
      %p115 = scmp.eq.s32.totalorder %s26, 0
      %p116 = por %p114, %p115
      %s118 = sadd.s32 %s117, 1
      %p121 = scmp.eq.s32.totalorder %s20, 1
      %p122 = scmp.ne.s32.totalorder %s117, %s119
      %p123 = scmp.eq.s32.totalorder %s20, 0
      %p124 = por %p122, %p123
      %p125 = scmp.ne.s32.totalorder %s117, %s119
      %p126 = scmp.eq.s32.totalorder %s25, 1
      %p127 = por %p125, %p126
      %p128 = scmp.ne.s32.totalorder %s119, %s120
      %p129 = scmp.eq.s32.totalorder %s25, 0
      %p130 = por %p128, %p129
      %p131 = scmp.ne.s32.totalorder %s119, %s120
      %p132 = scmp.eq.s32.totalorder %s26, 1
      %p133 = por %p131, %p132
      %p135 = scmp.ne.s32.totalorder %s120, %s134
      %p136 = scmp.eq.s32.totalorder %s26, 0
      %p137 = por %p135, %p136
      %s139 = sadd.s32 %s138, 1
      %p142 = scmp.eq.s32.totalorder %s20, 1
      %p143 = scmp.ne.s32.totalorder %s138, %s140
      %p144 = scmp.eq.s32.totalorder %s20, 0
      %p145 = por %p143, %p144
      %p146 = scmp.ne.s32.totalorder %s138, %s140
      %p147 = scmp.eq.s32.totalorder %s25, 1
      %p148 = por %p146, %p147
      %p149 = scmp.ne.s32.totalorder %s140, %s141
      %p150 = scmp.eq.s32.totalorder %s25, 0
      %p151 = por %p149, %p150
      %p152 = scmp.ne.s32.totalorder %s140, %s141
      %p153 = scmp.eq.s32.totalorder %s26, 1
      %p154 = por %p152, %p153
      %p156 = scmp.ne.s32.totalorder %s141, %s155
      %p157 = scmp.eq.s32.totalorder %s26, 0
      %p158 = por %p156, %p157
      %s160 = sadd.s32 %s159, 1
      %p163 = scmp.eq.s32.totalorder %s20, 1
      %p164 = scmp.ne.s32.totalorder %s159, %s161
      %p165 = scmp.eq.s32.totalorder %s20, 0
      %p166 = por %p164, %p165
      %p167 = scmp.ne.s32.totalorder %s159, %s161
      %p168 = scmp.eq.s32.totalorder %s25, 1
      %p169 = por %p167, %p168
      %p170 = scmp.ne.s32.totalorder %s161, %s162
      %p171 = scmp.eq.s32.totalorder %s25, 0
      %p172 = por %p170, %p171
      %p173 = scmp.ne.s32.totalorder %s161, %s162
      %p174 = scmp.eq.s32.totalorder %s26, 1
      %p175 = por %p173, %p174
      %p177 = scmp.ne.s32.totalorder %s162, %s176
      %p178 = scmp.eq.s32.totalorder %s26, 0
      %p179 = por %p177, %p178
      %s181 = sadd.s32 %s180, 1
      %p184 = scmp.eq.s32.totalorder %s20, 1
      %p185 = scmp.ne.s32.totalorder %s180, %s182
      %p186 = scmp.eq.s32.totalorder %s20, 0
      %p187 = por %p185, %p186
      %p188 = scmp.ne.s32.totalorder %s180, %s182
      %p189 = scmp.eq.s32.totalorder %s25, 1
      %p190 = por %p188, %p189
      %p191 = scmp.ne.s32.totalorder %s182, %s183
      %p192 = scmp.eq.s32.totalorder %s25, 0
      %p193 = por %p191, %p192
      %p194 = scmp.ne.s32.totalorder %s182, %s183
      %p195 = scmp.eq.s32.totalorder %s26, 1
      %p196 = por %p194, %p195
      %p198 = scmp.ne.s32.totalorder %s183, %s197
      %p199 = scmp.eq.s32.totalorder %s26, 0
      %p200 = por %p198, %p199
      %s202 = sadd.s32 %s201, 1
      %p205 = scmp.eq.s32.totalorder %s20, 1
      %p206 = scmp.ne.s32.totalorder %s201, %s203
      %p207 = scmp.eq.s32.totalorder %s20, 0
      %p208 = por %p206, %p207
      %p209 = scmp.ne.s32.totalorder %s201, %s203
      %p210 = scmp.eq.s32.totalorder %s25, 1
      %p211 = por %p209, %p210
      %p212 = scmp.ne.s32.totalorder %s203, %s204
      %p213 = scmp.eq.s32.totalorder %s25, 0
      %p214 = por %p212, %p213
      %p215 = scmp.ne.s32.totalorder %s203, %s204
      %p216 = scmp.eq.s32.totalorder %s26, 1
      %p217 = por %p215, %p216
      %p219 = scmp.ne.s32.totalorder %s204, %s218
      %p220 = scmp.eq.s32.totalorder %s26, 0
      %p221 = por %p219, %p220
      %s223 = sadd.s32 %s222, 1
      %p226 = scmp.eq.s32.totalorder %s20, 1
      %p227 = scmp.ne.s32.totalorder %s222, %s224
      %p228 = scmp.eq.s32.totalorder %s20, 0
      %p229 = por %p227, %p228
      %p230 = scmp.ne.s32.totalorder %s222, %s224
      %p231 = scmp.eq.s32.totalorder %s25, 1
      %p232 = por %p230, %p231
      %p233 = scmp.ne.s32.totalorder %s224, %s225
      %p234 = scmp.eq.s32.totalorder %s25, 0
      %p235 = por %p233, %p234
      %p236 = scmp.ne.s32.totalorder %s224, %s225
      %p237 = scmp.eq.s32.totalorder %s26, 1
      %p238 = por %p236, %p237
      %p240 = scmp.ne.s32.totalorder %s225, %s239
      %p241 = scmp.eq.s32.totalorder %s26, 0
      %p242 = por %p240, %p241
      %s244 = sadd.s32 %s243, 1
      %p247 = scmp.eq.s32.totalorder %s20, 1
      %p248 = scmp.ne.s32.totalorder %s243, %s245
      %p249 = scmp.eq.s32.totalorder %s20, 0
      %p250 = por %p248, %p249
      %p251 = scmp.ne.s32.totalorder %s243, %s245
      %p252 = scmp.eq.s32.totalorder %s25, 1
      %p253 = por %p251, %p252
      %p254 = scmp.ne.s32.totalorder %s245, %s246
      %p255 = scmp.eq.s32.totalorder %s25, 0
      %p256 = por %p254, %p255
      %p257 = scmp.ne.s32.totalorder %s245, %s246
      %p258 = scmp.eq.s32.totalorder %s26, 1
      %p259 = por %p257, %p258
      %p261 = scmp.ne.s32.totalorder %s246, %s260
      %p262 = scmp.eq.s32.totalorder %s26, 0
      %p263 = por %p261, %p262
      %s264 = ssub.s32 %s20, %s27
      %p265 = scmp.eq.s32.totalorder %s264, 0
      %s267 = sadd.s32 %s266, 1
      %s268 = scalar_select %p265, %s266, %s267
      %p271 = pneg %p265
      %p272 = scmp.eq.s32.totalorder %s20, 1
      %p273 = por %p271, %p272
      %p274 = scmp.ne.s32.totalorder %s266, %s269
      %p275 = scmp.eq.s32.totalorder %s20, 0
      %p276 = por %p274, %p275
      %p277 = scmp.ne.s32.totalorder %s266, %s269
      %p278 = scmp.eq.s32.totalorder %s25, 1
      %p279 = por %p277, %p278
      %p280 = scmp.ne.s32.totalorder %s269, %s270
      %p281 = scmp.eq.s32.totalorder %s25, 0
      %p282 = por %p280, %p281
      %p283 = scmp.ne.s32.totalorder %s269, %s270
      %p284 = scmp.eq.s32.totalorder %s26, 1
      %p285 = por %p283, %p284
      %p287 = scmp.ne.s32.totalorder %s270, %s286
      %p288 = scmp.eq.s32.totalorder %s26, 0
      %p289 = por %p287, %p288
      %p290 = scmp.le.s32.totalorder 1, %s20
      %p291 = scmp.lt.s32.totalorder %s20, 3
      %p292 = pnand %p290, %p291
      %p293 = pneg %p292
      // Predicated region
      $region9: #{autoencoder_forward.1} parent=5 // pred_check
        _
      $region10: #{autoencoder_forward.1} parent=5 // pred_check_branch
        %295 = sbr.rel (%p292) target = $region12
      $region11: #{autoencoder_forward.1} parent=5 // pred_region
        %s296 = ssub.s32 %s20, 1
        // Predicated region
        $region13: #{autoencoder_forward.1} parent=11 // pred_check
          %p297 = pneg %p67
        $region14: #{autoencoder_forward.1} parent=11 // pred_check_branch
          %299 = sbr.rel (%p297) target = $region16
        $region15: #{autoencoder_forward.1} parent=11 // pred_region
          _
        $region16: #{autoencoder_forward.1} parent=11 // pred_fallthru
          _
        // Predicated region
        $region17: #{autoencoder_forward.1} parent=11 // pred_check
          %p300 = pneg %p88
        $region18: #{autoencoder_forward.1} parent=11 // pred_check_branch
          %302 = sbr.rel (%p300) target = $region20
        $region19: #{autoencoder_forward.1} parent=11 // pred_region
          _
        $region20: #{autoencoder_forward.1} parent=11 // pred_fallthru
          _
        // Predicated region
        $region21: #{autoencoder_forward.1} parent=11 // pred_check
          %p303 = pneg %p109
        $region22: #{autoencoder_forward.1} parent=11 // pred_check_branch
          %305 = sbr.rel (%p303) target = $region24
        $region23: #{autoencoder_forward.1} parent=11 // pred_region
          _
        $region24: #{autoencoder_forward.1} parent=11 // pred_fallthru
          _
        // Predicated region
        $region25: #{autoencoder_forward.1} parent=11 // pred_check
          %p306 = pneg %p130
        $region26: #{autoencoder_forward.1} parent=11 // pred_check_branch
          %308 = sbr.rel (%p306) target = $region28
        $region27: #{autoencoder_forward.1} parent=11 // pred_region
          _
        $region28: #{autoencoder_forward.1} parent=11 // pred_fallthru
          _
        // Predicated region
        $region29: #{autoencoder_forward.1} parent=11 // pred_check
          %p309 = pneg %p151
        $region30: #{autoencoder_forward.1} parent=11 // pred_check_branch
          %311 = sbr.rel (%p309) target = $region32
        $region31: #{autoencoder_forward.1} parent=11 // pred_region
          _
        $region32: #{autoencoder_forward.1} parent=11 // pred_fallthru
          _
        // Predicated region
        $region33: #{autoencoder_forward.1} parent=11 // pred_check
          %p312 = pneg %p172
        $region34: #{autoencoder_forward.1} parent=11 // pred_check_branch
          %314 = sbr.rel (%p312) target = $region36
        $region35: #{autoencoder_forward.1} parent=11 // pred_region
          _
        $region36: #{autoencoder_forward.1} parent=11 // pred_fallthru
          _
        // Predicated region
        $region37: #{autoencoder_forward.1} parent=11 // pred_check
          %p315 = pneg %p193
        $region38: #{autoencoder_forward.1} parent=11 // pred_check_branch
          %317 = sbr.rel (%p315) target = $region40
        $region39: #{autoencoder_forward.1} parent=11 // pred_region
          _
        $region40: #{autoencoder_forward.1} parent=11 // pred_fallthru
          _
        // Predicated region
        $region41: #{autoencoder_forward.1} parent=11 // pred_check
          %p318 = pneg %p214
        $region42: #{autoencoder_forward.1} parent=11 // pred_check_branch
          %320 = sbr.rel (%p318) target = $region44
        $region43: #{autoencoder_forward.1} parent=11 // pred_region
          _
        $region44: #{autoencoder_forward.1} parent=11 // pred_fallthru
          _
        // Predicated region
        $region45: #{autoencoder_forward.1} parent=11 // pred_check
          %p321 = pneg %p235
        $region46: #{autoencoder_forward.1} parent=11 // pred_check_branch
          %323 = sbr.rel (%p321) target = $region48
        $region47: #{autoencoder_forward.1} parent=11 // pred_region
          _
        $region48: #{autoencoder_forward.1} parent=11 // pred_fallthru
          _
        // Predicated region
        $region49: #{autoencoder_forward.1} parent=11 // pred_check
          %p324 = pneg %p256
        $region50: #{autoencoder_forward.1} parent=11 // pred_check_branch
          %326 = sbr.rel (%p324) target = $region52
        $region51: #{autoencoder_forward.1} parent=11 // pred_region
          _
        $region52: #{autoencoder_forward.1} parent=11 // pred_fallthru
          _
      $region12: #{autoencoder_forward.1} parent=5 // pred_fallthru
        _
      %p327 = scmp.lt.s32.totalorder %s20, 2
      // Predicated region
      $region53: #{autoencoder_forward.1} parent=5 // pred_check
        %p328 = pneg %p327
      $region54: #{autoencoder_forward.1} parent=5 // pred_check_branch
        %330 = sbr.rel (%p328) target = $region56
      $region55: #{autoencoder_forward.1} parent=5 // pred_region
        // Predicated region
        $region57: #{autoencoder_forward.1} parent=55 // pred_check
          %p331 = pneg %p40
        $region58: #{autoencoder_forward.1} parent=55 // pred_check_branch
          %333 = sbr.rel (%p331) target = $region60
        $region59: #{autoencoder_forward.1} parent=55 // pred_region
          %s334 = smul.u32 16, %s20
          %p335 = scmp.lt.s32.totalorder %s334, 31
          %s336 = scalar_select %p335, %s334, 31
          %s337 = smul.addr %s336, 8
          %s338 = scalar_lea.vmem %s0, %s337
          %s339 = smul.u32 16, %s20
        $region60: #{autoencoder_forward.1} parent=55 // pred_fallthru
          _
      $region56: #{autoencoder_forward.1} parent=5 // pred_fallthru
        _
      %p340 = scmp.le.s32.totalorder 1, %s20
      %p341 = scmp.lt.s32.totalorder %s20, 3
      %p342 = pnand %p340, %p341
      %p343 = pneg %p342
      // Predicated region
      $region61: #{autoencoder_forward.1} parent=5 // pred_check
        _
      $region62: #{autoencoder_forward.1} parent=5 // pred_check_branch
        %345 = sbr.rel (%p342) target = $region64
      $region63: #{autoencoder_forward.1} parent=5 // pred_region
        %s346 = ssub.s32 %s20, 1
        %s347 = smul.u32 16, %s25
        %p348 = scmp.lt.s32.totalorder %s347, 31
        %s349 = scalar_select %p348, %s347, 31
        %s350 = smul.addr %s349, 8
        %s351 = scalar_lea.vmem %s0, %s350
        %p352 = pneg %p46
        %p353 = pneg %p43
        %p354 = pneg %p67
        %p355 = pneg %p64
        %p356 = pneg %p88
        %p357 = pneg %p85
        %p358 = pneg %p109
        %p359 = pneg %p106
        %p360 = pneg %p130
        %p361 = pneg %p127
        %p362 = pneg %p151
        %p363 = pneg %p148
        %p364 = pneg %p172
        %p365 = pneg %p169
        %p366 = pneg %p193
        %p367 = pneg %p190
        %p368 = pneg %p214
        %p369 = pneg %p211
        %p370 = pneg %p235
        %p371 = pneg %p232
        %p372 = pneg %p256
        %p373 = pneg %p253
        %p374 = pneg %p282
        %p375 = pneg %p279
        %s376 = sand.u32 %s269, 1
        %s377 = scalar_lea.sflag [#allocation3], %s376
        %s378 = sand.u32 %s269, 1
        %s379 = smul.addr %s378, 128
        %s380 = scalar_lea.vmem [#allocation2], %s379
        %s381 = smul.u32 16, %s25
        %p382 = scmp.lt.s32.totalorder %s381, 31
        %s383 = scalar_select %p382, %s381, 31
        %s384 = smul.addr %s383, 8
        %s385 = scalar_lea.vmem %s0, %s384
        %s386 = smul.u32 16, %s25
        %s387 = smul.u32 16, %s25
        %v388 = vld [vmem:[%s385] sm:$0xff]
        %v389 = vld [vmem:[%s385 + $0x8] sm:$0xff]
        %v390 = vld [vmem:[%s385 + $0x10] sm:$0xff]
        %v391 = vld [vmem:[%s385 + $0x18] sm:$0xff]
        %v392 = vld [vmem:[%s385 + $0x20] sm:$0xff]
        %v393 = vld [vmem:[%s385 + $0x28] sm:$0xff]
        %v394 = vld [vmem:[%s385 + $0x30] sm:$0xff]
        %v395 = vld [vmem:[%s385 + $0x38] sm:$0xff]
        %v396 = vld [vmem:[%s385 + $0x40] sm:$0xff]
        %v397 = vld [vmem:[%s385 + $0x48] sm:$0xff]
        %v398 = vld [vmem:[%s385 + $0x50] sm:$0xff]
        %v399 = vld [vmem:[%s385 + $0x58] sm:$0xff]
        %v400 = vld [vmem:[%s385 + $0x60] sm:$0xff]
        %v401 = vld [vmem:[%s385 + $0x68] sm:$0xff]
        %v402 = vld [vmem:[%s385 + $0x70] sm:$0xff]
        %v403 = vld [vmem:[%s385 + $0x78] sm:$0xff]
        %v404 = vpack.c.bf16 %v389, %v388
        %v405 = vpack.c.bf16 %v391, %v390
        %v406 = vpack.c.bf16 %v393, %v392
        %v407 = vpack.c.bf16 %v395, %v394
        %v408 = vpack.c.bf16 %v397, %v396
        %v409 = vpack.c.bf16 %v399, %v398
        %v410 = vpack.c.bf16 %v401, %v400
        %v411 = vpack.c.bf16 %v403, %v402
        %v412 = vld [vmem:[%s1] sm:$0xf]
        %v413 = vld [vmem:[%s1 + $0x4] sm:$0xf]
        %v414 = vld [vmem:[%s1 + $0x8] sm:$0xf]
        %v415 = vld [vmem:[%s1 + $0xc] sm:$0xf]
        %v416 = vld [vmem:[%s1 + $0x10] sm:$0xf]
        %v417 = vld [vmem:[%s1 + $0x14] sm:$0xf]
        %v418 = vld [vmem:[%s1 + $0x18] sm:$0xf]
        %v419 = vld [vmem:[%s1 + $0x1c] sm:$0xf]
        %v420 = vld [vmem:[%s1 + $0x20] sm:$0xf]
        %v421 = vld [vmem:[%s1 + $0x24] sm:$0xf]
        %v422 = vld [vmem:[%s1 + $0x28] sm:$0xf]
        %v423 = vld [vmem:[%s1 + $0x2c] sm:$0xf]
        %v424 = vld [vmem:[%s1 + $0x30] sm:$0xf]
        %v425 = vld [vmem:[%s1 + $0x34] sm:$0xf]
        %v426 = vld [vmem:[%s1 + $0x38] sm:$0xf]
        %v427 = vld [vmem:[%s1 + $0x3c] sm:$0xf]
        %v428 = vld [vmem:[%s2] sm:$0x1]
        %v430 = vperm.slane %v428, 0
        %v448 = vunpack.c.l.b16 %v412
        %v449 = vunpack.c.l.b16 %v413
        %v450 = vunpack.c.l.b16 %v414
        %v451 = vunpack.c.l.b16 %v415
        %v452 = vunpack.c.l.b16 %v416
        %v453 = vunpack.c.l.b16 %v417
        %v454 = vunpack.c.l.b16 %v418
        %v455 = vunpack.c.l.b16 %v419
        %v456 = vunpack.c.l.b16 %v420
        %v457 = vunpack.c.l.b16 %v421
        %v458 = vunpack.c.l.b16 %v422
        %v459 = vunpack.c.l.b16 %v423
        %v460 = vunpack.c.l.b16 %v424
        %v461 = vunpack.c.l.b16 %v425
        %v462 = vunpack.c.l.b16 %v426
        %v463 = vunpack.c.l.b16 %v427
        %v464 = vpack.c.b16 %v449, %v448
        %v465 = vpack.c.b16 %v451, %v450
        %v466 = vpack.c.b16 %v453, %v452
        %v467 = vpack.c.b16 %v455, %v454
        %v468 = vpack.c.b16 %v457, %v456
        %v469 = vpack.c.b16 %v459, %v458
        %v470 = vpack.c.b16 %v461, %v460
        %v471 = vpack.c.b16 %v463, %v462
        %480 = vmatpush.bf16.msra.mxu0 %v471
        %481 = vmatpush.bf16.msra.mxu0 %v470
        %482 = vmatpush.bf16.msra.mxu0 %v469
        %483 = vmatpush.bf16.msra.mxu0 %v468
        %484 = vmatpush.bf16.msra.mxu0 %v467
        %485 = vmatpush.bf16.msra.mxu0 %v466
        %486 = vmatpush.bf16.msra.mxu0 %v465
        %487 = vmatpush.bf16.msra.mxu0 %v464
        %488 = vmatmul.bf16.gmra.mxu0 %v404
        %v489 = vpop.f32.mrf.mxu0
        %v490 = vadd.f32 %v430, %v489
        %v491 = vpop.f32.mrf.mxu0
        %v492 = vadd.f32 %v430, %v491
        %493 = vmatmul.bf16.gmra.mxu0 %v405
        %v494 = vpop.f32.mrf.mxu0
        %v495 = vadd.f32 %v430, %v494
        %v496 = vpop.f32.mrf.mxu0
        %v497 = vadd.f32 %v430, %v496
        %498 = vmatmul.bf16.gmra.mxu0 %v406
        %v499 = vpop.f32.mrf.mxu0
        %v500 = vadd.f32 %v430, %v499
        %v501 = vpop.f32.mrf.mxu0
        %v502 = vadd.f32 %v430, %v501
        %503 = vmatmul.bf16.gmra.mxu0 %v407
        %v504 = vpop.f32.mrf.mxu0
        %v505 = vadd.f32 %v430, %v504
        %v506 = vpop.f32.mrf.mxu0
        %v507 = vadd.f32 %v430, %v506
        %508 = vmatmul.bf16.gmra.mxu0 %v408
        %v509 = vpop.f32.mrf.mxu0
        %v510 = vadd.f32 %v430, %v509
        %v511 = vpop.f32.mrf.mxu0
        %v512 = vadd.f32 %v430, %v511
        %513 = vmatmul.bf16.gmra.mxu0 %v409
        %v514 = vpop.f32.mrf.mxu0
        %v515 = vadd.f32 %v430, %v514
        %v516 = vpop.f32.mrf.mxu0
        %v517 = vadd.f32 %v430, %v516
        %518 = vmatmul.bf16.gmra.mxu0 %v410
        %v519 = vpop.f32.mrf.mxu0
        %v520 = vadd.f32 %v430, %v519
        %v521 = vpop.f32.mrf.mxu0
        %v522 = vadd.f32 %v430, %v521
        %523 = vmatmul.bf16.gmra.mxu0 %v411
        %v524 = vpop.f32.mrf.mxu0
        %v525 = vadd.f32 %v430, %v524
        %v526 = vpop.f32.mrf.mxu0
        %v527 = vadd.f32 %v430, %v526
        %528 = vdwg.mxu0
        %v529 = vmax.f32 %v490, 0.0
        %v530 = vmax.f32 %v492, 0.0
        %v531 = vmax.f32 %v495, 0.0
        %v532 = vmax.f32 %v497, 0.0
        %v533 = vmax.f32 %v500, 0.0
        %v534 = vmax.f32 %v502, 0.0
        %v535 = vmax.f32 %v505, 0.0
        %v536 = vmax.f32 %v507, 0.0
        %v537 = vmax.f32 %v510, 0.0
        %v538 = vmax.f32 %v512, 0.0
        %v539 = vmax.f32 %v515, 0.0
        %v540 = vmax.f32 %v517, 0.0
        %v541 = vmax.f32 %v520, 0.0
        %v542 = vmax.f32 %v522, 0.0
        %v543 = vmax.f32 %v525, 0.0
        %v544 = vmax.f32 %v527, 0.0
        %v545 = vpack.c.bf16 %v530, %v529
        %v546 = vpack.c.bf16 %v532, %v531
        %v547 = vpack.c.bf16 %v534, %v533
        %v548 = vpack.c.bf16 %v536, %v535
        %v549 = vpack.c.bf16 %v538, %v537
        %v550 = vpack.c.bf16 %v540, %v539
        %v551 = vpack.c.bf16 %v542, %v541
        %v552 = vpack.c.bf16 %v544, %v543
        %v553 = vld [vmem:[%s3] sm:$0xf]
        %v554 = vld [vmem:[%s3 + $0x4] sm:$0xf]
        %v555 = vld [vmem:[%s3 + $0x8] sm:$0xf]
        %v556 = vld [vmem:[%s3 + $0xc] sm:$0xf]
        %v557 = vld [vmem:[%s3 + $0x10] sm:$0xf]
        %v558 = vld [vmem:[%s3 + $0x14] sm:$0xf]
        %v559 = vld [vmem:[%s3 + $0x18] sm:$0xf]
        %v560 = vld [vmem:[%s3 + $0x1c] sm:$0xf]
        %v561 = vld [vmem:[%s3 + $0x20] sm:$0xf]
        %v562 = vld [vmem:[%s3 + $0x24] sm:$0xf]
        %v563 = vld [vmem:[%s3 + $0x28] sm:$0xf]
        %v564 = vld [vmem:[%s3 + $0x2c] sm:$0xf]
        %v565 = vld [vmem:[%s3 + $0x30] sm:$0xf]
        %v566 = vld [vmem:[%s3 + $0x34] sm:$0xf]
        %v567 = vld [vmem:[%s3 + $0x38] sm:$0xf]
        %v568 = vld [vmem:[%s3 + $0x3c] sm:$0xf]
        %v569 = vld [vmem:[%s4] sm:$0x1]
        %v571 = vperm.slane %v569, 0
        %v589 = vunpack.c.l.b16 %v553
        %v590 = vunpack.c.l.b16 %v554
        %v591 = vunpack.c.l.b16 %v555
        %v592 = vunpack.c.l.b16 %v556
        %v593 = vunpack.c.l.b16 %v557
        %v594 = vunpack.c.l.b16 %v558
        %v595 = vunpack.c.l.b16 %v559
        %v596 = vunpack.c.l.b16 %v560
        %v597 = vunpack.c.l.b16 %v561
        %v598 = vunpack.c.l.b16 %v562
        %v599 = vunpack.c.l.b16 %v563
        %v600 = vunpack.c.l.b16 %v564
        %v601 = vunpack.c.l.b16 %v565
        %v602 = vunpack.c.l.b16 %v566
        %v603 = vunpack.c.l.b16 %v567
        %v604 = vunpack.c.l.b16 %v568
        %v605 = vpack.c.b16 %v590, %v589
        %v606 = vpack.c.b16 %v592, %v591
        %v607 = vpack.c.b16 %v594, %v593
        %v608 = vpack.c.b16 %v596, %v595
        %v609 = vpack.c.b16 %v598, %v597
        %v610 = vpack.c.b16 %v600, %v599
        %v611 = vpack.c.b16 %v602, %v601
        %v612 = vpack.c.b16 %v604, %v603
        %621 = vmatpush.bf16.msra.mxu0 %v612
        %622 = vmatpush.bf16.msra.mxu0 %v611
        %623 = vmatpush.bf16.msra.mxu0 %v610
        %624 = vmatpush.bf16.msra.mxu0 %v609
        %625 = vmatpush.bf16.msra.mxu0 %v608
        %626 = vmatpush.bf16.msra.mxu0 %v607
        %627 = vmatpush.bf16.msra.mxu0 %v606
        %628 = vmatpush.bf16.msra.mxu0 %v605
        %629 = vmatmul.bf16.gmra.mxu0 %v545
        %v630 = vpop.f32.mrf.mxu0
        %v631 = vadd.f32 %v571, %v630
        %v632 = vpop.f32.mrf.mxu0
        %v633 = vadd.f32 %v571, %v632
        %634 = vmatmul.bf16.gmra.mxu0 %v546
        %v635 = vpop.f32.mrf.mxu0
        %v636 = vadd.f32 %v571, %v635
        %v637 = vpop.f32.mrf.mxu0
        %v638 = vadd.f32 %v571, %v637
        %639 = vmatmul.bf16.gmra.mxu0 %v547
        %v640 = vpop.f32.mrf.mxu0
        %v641 = vadd.f32 %v571, %v640
        %v642 = vpop.f32.mrf.mxu0
        %v643 = vadd.f32 %v571, %v642
        %644 = vmatmul.bf16.gmra.mxu0 %v548
        %v645 = vpop.f32.mrf.mxu0
        %v646 = vadd.f32 %v571, %v645
        %v647 = vpop.f32.mrf.mxu0
        %v648 = vadd.f32 %v571, %v647
        %649 = vmatmul.bf16.gmra.mxu0 %v549
        %v650 = vpop.f32.mrf.mxu0
        %v651 = vadd.f32 %v571, %v650
        %v652 = vpop.f32.mrf.mxu0
        %v653 = vadd.f32 %v571, %v652
        %654 = vmatmul.bf16.gmra.mxu0 %v550
        %v655 = vpop.f32.mrf.mxu0
        %v656 = vadd.f32 %v571, %v655
        %v657 = vpop.f32.mrf.mxu0
        %v658 = vadd.f32 %v571, %v657
        %659 = vmatmul.bf16.gmra.mxu0 %v551
        %v660 = vpop.f32.mrf.mxu0
        %v661 = vadd.f32 %v571, %v660
        %v662 = vpop.f32.mrf.mxu0
        %v663 = vadd.f32 %v571, %v662
        %664 = vmatmul.bf16.gmra.mxu0 %v552
        %v665 = vpop.f32.mrf.mxu0
        %v666 = vadd.f32 %v571, %v665
        %v667 = vpop.f32.mrf.mxu0
        %v668 = vadd.f32 %v571, %v667
        %669 = vdwg.mxu0
        %v670 = vmax.f32 %v631, 0.0
        %v671 = vmax.f32 %v633, 0.0
        %v672 = vmax.f32 %v636, 0.0
        %v673 = vmax.f32 %v638, 0.0
        %v674 = vmax.f32 %v641, 0.0
        %v675 = vmax.f32 %v643, 0.0
        %v676 = vmax.f32 %v646, 0.0
        %v677 = vmax.f32 %v648, 0.0
        %v678 = vmax.f32 %v651, 0.0
        %v679 = vmax.f32 %v653, 0.0
        %v680 = vmax.f32 %v656, 0.0
        %v681 = vmax.f32 %v658, 0.0
        %v682 = vmax.f32 %v661, 0.0
        %v683 = vmax.f32 %v663, 0.0
        %v684 = vmax.f32 %v666, 0.0
        %v685 = vmax.f32 %v668, 0.0
        %v686 = vpack.c.bf16 %v671, %v670
        %v687 = vpack.c.bf16 %v673, %v672
        %v688 = vpack.c.bf16 %v675, %v674
        %v689 = vpack.c.bf16 %v677, %v676
        %v690 = vpack.c.bf16 %v679, %v678
        %v691 = vpack.c.bf16 %v681, %v680
        %v692 = vpack.c.bf16 %v683, %v682
        %v693 = vpack.c.bf16 %v685, %v684
        %v694 = vld [vmem:[%s5] sm:$0xf]
        %v695 = vld [vmem:[%s5 + $0x4] sm:$0xf]
        %v696 = vld [vmem:[%s5 + $0x8] sm:$0xf]
        %v697 = vld [vmem:[%s5 + $0xc] sm:$0xf]
        %v698 = vld [vmem:[%s5 + $0x10] sm:$0xf]
        %v699 = vld [vmem:[%s5 + $0x14] sm:$0xf]
        %v700 = vld [vmem:[%s5 + $0x18] sm:$0xf]
        %v701 = vld [vmem:[%s5 + $0x1c] sm:$0xf]
        %v702 = vld [vmem:[%s5 + $0x20] sm:$0xf]
        %v703 = vld [vmem:[%s5 + $0x24] sm:$0xf]
        %v704 = vld [vmem:[%s5 + $0x28] sm:$0xf]
        %v705 = vld [vmem:[%s5 + $0x2c] sm:$0xf]
        %v706 = vld [vmem:[%s5 + $0x30] sm:$0xf]
        %v707 = vld [vmem:[%s5 + $0x34] sm:$0xf]
        %v708 = vld [vmem:[%s5 + $0x38] sm:$0xf]
        %v709 = vld [vmem:[%s5 + $0x3c] sm:$0xf]
        %v710 = vld [vmem:[%s6] sm:$0x1]
        %v712 = vperm.slane %v710, 0
        %v730 = vunpack.c.l.b16 %v694
        %v731 = vunpack.c.l.b16 %v695
        %v732 = vunpack.c.l.b16 %v696
        %v733 = vunpack.c.l.b16 %v697
        %v734 = vunpack.c.l.b16 %v698
        %v735 = vunpack.c.l.b16 %v699
        %v736 = vunpack.c.l.b16 %v700
        %v737 = vunpack.c.l.b16 %v701
        %v738 = vunpack.c.l.b16 %v702
        %v739 = vunpack.c.l.b16 %v703
        %v740 = vunpack.c.l.b16 %v704
        %v741 = vunpack.c.l.b16 %v705
        %v742 = vunpack.c.l.b16 %v706
        %v743 = vunpack.c.l.b16 %v707
        %v744 = vunpack.c.l.b16 %v708
        %v745 = vunpack.c.l.b16 %v709
        %v746 = vpack.c.b16 %v731, %v730
        %v747 = vpack.c.b16 %v733, %v732
        %v748 = vpack.c.b16 %v735, %v734
        %v749 = vpack.c.b16 %v737, %v736
        %v750 = vpack.c.b16 %v739, %v738
        %v751 = vpack.c.b16 %v741, %v740
        %v752 = vpack.c.b16 %v743, %v742
        %v753 = vpack.c.b16 %v745, %v744
        %762 = vmatpush.bf16.msra.mxu0 %v753
        %763 = vmatpush.bf16.msra.mxu0 %v752
        %764 = vmatpush.bf16.msra.mxu0 %v751
        %765 = vmatpush.bf16.msra.mxu0 %v750
        %766 = vmatpush.bf16.msra.mxu0 %v749
        %767 = vmatpush.bf16.msra.mxu0 %v748
        %768 = vmatpush.bf16.msra.mxu0 %v747
        %769 = vmatpush.bf16.msra.mxu0 %v746
        %770 = vmatmul.bf16.gmra.mxu0 %v686
        %v771 = vpop.f32.mrf.mxu0
        %v772 = vadd.f32 %v712, %v771
        %v773 = vpop.f32.mrf.mxu0
        %v774 = vadd.f32 %v712, %v773
        %775 = vmatmul.bf16.gmra.mxu0 %v687
        %v776 = vpop.f32.mrf.mxu0
        %v777 = vadd.f32 %v712, %v776
        %v778 = vpop.f32.mrf.mxu0
        %v779 = vadd.f32 %v712, %v778
        %780 = vmatmul.bf16.gmra.mxu0 %v688
        %v781 = vpop.f32.mrf.mxu0
        %v782 = vadd.f32 %v712, %v781
        %v783 = vpop.f32.mrf.mxu0
        %v784 = vadd.f32 %v712, %v783
        %785 = vmatmul.bf16.gmra.mxu0 %v689
        %v786 = vpop.f32.mrf.mxu0
        %v787 = vadd.f32 %v712, %v786
        %v788 = vpop.f32.mrf.mxu0
        %v789 = vadd.f32 %v712, %v788
        %790 = vmatmul.bf16.gmra.mxu0 %v690
        %v791 = vpop.f32.mrf.mxu0
        %v792 = vadd.f32 %v712, %v791
        %v793 = vpop.f32.mrf.mxu0
        %v794 = vadd.f32 %v712, %v793
        %795 = vmatmul.bf16.gmra.mxu0 %v691
        %v796 = vpop.f32.mrf.mxu0
        %v797 = vadd.f32 %v712, %v796
        %v798 = vpop.f32.mrf.mxu0
        %v799 = vadd.f32 %v712, %v798
        %800 = vmatmul.bf16.gmra.mxu0 %v692
        %v801 = vpop.f32.mrf.mxu0
        %v802 = vadd.f32 %v712, %v801
        %v803 = vpop.f32.mrf.mxu0
        %v804 = vadd.f32 %v712, %v803
        %805 = vmatmul.bf16.gmra.mxu0 %v693
        %v806 = vpop.f32.mrf.mxu0
        %v807 = vadd.f32 %v712, %v806
        %v808 = vpop.f32.mrf.mxu0
        %v809 = vadd.f32 %v712, %v808
        %810 = vdwg.mxu0
        %v811 = vmax.f32 %v772, 0.0
        %v812 = vmax.f32 %v774, 0.0
        %v813 = vmax.f32 %v777, 0.0
        %v814 = vmax.f32 %v779, 0.0
        %v815 = vmax.f32 %v782, 0.0
        %v816 = vmax.f32 %v784, 0.0
        %v817 = vmax.f32 %v787, 0.0
        %v818 = vmax.f32 %v789, 0.0
        %v819 = vmax.f32 %v792, 0.0
        %v820 = vmax.f32 %v794, 0.0
        %v821 = vmax.f32 %v797, 0.0
        %v822 = vmax.f32 %v799, 0.0
        %v823 = vmax.f32 %v802, 0.0
        %v824 = vmax.f32 %v804, 0.0
        %v825 = vmax.f32 %v807, 0.0
        %v826 = vmax.f32 %v809, 0.0
        %v827 = vpack.c.bf16 %v812, %v811
        %v828 = vpack.c.bf16 %v814, %v813
        %v829 = vpack.c.bf16 %v816, %v815
        %v830 = vpack.c.bf16 %v818, %v817
        %v831 = vpack.c.bf16 %v820, %v819
        %v832 = vpack.c.bf16 %v822, %v821
        %v833 = vpack.c.bf16 %v824, %v823
        %v834 = vpack.c.bf16 %v826, %v825
        %v835 = vld [vmem:[%s7] sm:$0xf]
        %v836 = vld [vmem:[%s7 + $0x4] sm:$0xf]
        %v837 = vld [vmem:[%s7 + $0x8] sm:$0xf]
        %v838 = vld [vmem:[%s7 + $0xc] sm:$0xf]
        %v839 = vld [vmem:[%s7 + $0x10] sm:$0xf]
        %v840 = vld [vmem:[%s7 + $0x14] sm:$0xf]
        %v841 = vld [vmem:[%s7 + $0x18] sm:$0xf]
        %v842 = vld [vmem:[%s7 + $0x1c] sm:$0xf]
        %v843 = vld [vmem:[%s7 + $0x20] sm:$0xf]
        %v844 = vld [vmem:[%s7 + $0x24] sm:$0xf]
        %v845 = vld [vmem:[%s7 + $0x28] sm:$0xf]
        %v846 = vld [vmem:[%s7 + $0x2c] sm:$0xf]
        %v847 = vld [vmem:[%s7 + $0x30] sm:$0xf]
        %v848 = vld [vmem:[%s7 + $0x34] sm:$0xf]
        %v849 = vld [vmem:[%s7 + $0x38] sm:$0xf]
        %v850 = vld [vmem:[%s7 + $0x3c] sm:$0xf]
        %v851 = vld [vmem:[%s8] sm:$0x1]
        %v853 = vperm.slane %v851, 0
        %v871 = vunpack.c.l.b16 %v835
        %v872 = vunpack.c.l.b16 %v836
        %v873 = vunpack.c.l.b16 %v837
        %v874 = vunpack.c.l.b16 %v838
        %v875 = vunpack.c.l.b16 %v839
        %v876 = vunpack.c.l.b16 %v840
        %v877 = vunpack.c.l.b16 %v841
        %v878 = vunpack.c.l.b16 %v842
        %v879 = vunpack.c.l.b16 %v843
        %v880 = vunpack.c.l.b16 %v844
        %v881 = vunpack.c.l.b16 %v845
        %v882 = vunpack.c.l.b16 %v846
        %v883 = vunpack.c.l.b16 %v847
        %v884 = vunpack.c.l.b16 %v848
        %v885 = vunpack.c.l.b16 %v849
        %v886 = vunpack.c.l.b16 %v850
        %v887 = vpack.c.b16 %v872, %v871
        %v888 = vpack.c.b16 %v874, %v873
        %v889 = vpack.c.b16 %v876, %v875
        %v890 = vpack.c.b16 %v878, %v877
        %v891 = vpack.c.b16 %v880, %v879
        %v892 = vpack.c.b16 %v882, %v881
        %v893 = vpack.c.b16 %v884, %v883
        %v894 = vpack.c.b16 %v886, %v885
        %903 = vmatpush.bf16.msra.mxu0 %v894
        %904 = vmatpush.bf16.msra.mxu0 %v893
        %905 = vmatpush.bf16.msra.mxu0 %v892
        %906 = vmatpush.bf16.msra.mxu0 %v891
        %907 = vmatpush.bf16.msra.mxu0 %v890
        %908 = vmatpush.bf16.msra.mxu0 %v889
        %909 = vmatpush.bf16.msra.mxu0 %v888
        %910 = vmatpush.bf16.msra.mxu0 %v887
        %911 = vmatmul.bf16.gmra.mxu0 %v827
        %v912 = vpop.f32.mrf.mxu0
        %v913 = vadd.f32 %v853, %v912
        %v914 = vpop.f32.mrf.mxu0
        %v915 = vadd.f32 %v853, %v914
        %916 = vmatmul.bf16.gmra.mxu0 %v828
        %v917 = vpop.f32.mrf.mxu0
        %v918 = vadd.f32 %v853, %v917
        %v919 = vpop.f32.mrf.mxu0
        %v920 = vadd.f32 %v853, %v919
        %921 = vmatmul.bf16.gmra.mxu0 %v829
        %v922 = vpop.f32.mrf.mxu0
        %v923 = vadd.f32 %v853, %v922
        %v924 = vpop.f32.mrf.mxu0
        %v925 = vadd.f32 %v853, %v924
        %926 = vmatmul.bf16.gmra.mxu0 %v830
        %v927 = vpop.f32.mrf.mxu0
        %v928 = vadd.f32 %v853, %v927
        %v929 = vpop.f32.mrf.mxu0
        %v930 = vadd.f32 %v853, %v929
        %931 = vmatmul.bf16.gmra.mxu0 %v831
        %v932 = vpop.f32.mrf.mxu0
        %v933 = vadd.f32 %v853, %v932
        %v934 = vpop.f32.mrf.mxu0
        %v935 = vadd.f32 %v853, %v934
        %936 = vmatmul.bf16.gmra.mxu0 %v832
        %v937 = vpop.f32.mrf.mxu0
        %v938 = vadd.f32 %v853, %v937
        %v939 = vpop.f32.mrf.mxu0
        %v940 = vadd.f32 %v853, %v939
        %941 = vmatmul.bf16.gmra.mxu0 %v833
        %v942 = vpop.f32.mrf.mxu0
        %v943 = vadd.f32 %v853, %v942
        %v944 = vpop.f32.mrf.mxu0
        %v945 = vadd.f32 %v853, %v944
        %946 = vmatmul.bf16.gmra.mxu0 %v834
        %v947 = vpop.f32.mrf.mxu0
        %v948 = vadd.f32 %v853, %v947
        %v949 = vpop.f32.mrf.mxu0
        %v950 = vadd.f32 %v853, %v949
        %951 = vdwg.mxu0
        %v952 = vmax.f32 %v913, 0.0
        %v953 = vmax.f32 %v915, 0.0
        %v954 = vmax.f32 %v918, 0.0
        %v955 = vmax.f32 %v920, 0.0
        %v956 = vmax.f32 %v923, 0.0
        %v957 = vmax.f32 %v925, 0.0
        %v958 = vmax.f32 %v928, 0.0
        %v959 = vmax.f32 %v930, 0.0
        %v960 = vmax.f32 %v933, 0.0
        %v961 = vmax.f32 %v935, 0.0
        %v962 = vmax.f32 %v938, 0.0
        %v963 = vmax.f32 %v940, 0.0
        %v964 = vmax.f32 %v943, 0.0
        %v965 = vmax.f32 %v945, 0.0
        %v966 = vmax.f32 %v948, 0.0
        %v967 = vmax.f32 %v950, 0.0
        %v968 = vpack.c.bf16 %v953, %v952
        %v969 = vpack.c.bf16 %v955, %v954
        %v970 = vpack.c.bf16 %v957, %v956
        %v971 = vpack.c.bf16 %v959, %v958
        %v972 = vpack.c.bf16 %v961, %v960
        %v973 = vpack.c.bf16 %v963, %v962
        %v974 = vpack.c.bf16 %v965, %v964
        %v975 = vpack.c.bf16 %v967, %v966
        %v976 = vld [vmem:[%s9] sm:$0xf]
        %v977 = vld [vmem:[%s9 + $0x4] sm:$0xf]
        %v978 = vld [vmem:[%s9 + $0x8] sm:$0xf]
        %v979 = vld [vmem:[%s9 + $0xc] sm:$0xf]
        %v980 = vld [vmem:[%s9 + $0x10] sm:$0xf]
        %v981 = vld [vmem:[%s9 + $0x14] sm:$0xf]
        %v982 = vld [vmem:[%s9 + $0x18] sm:$0xf]
        %v983 = vld [vmem:[%s9 + $0x1c] sm:$0xf]
        %v984 = vld [vmem:[%s9 + $0x20] sm:$0xf]
        %v985 = vld [vmem:[%s9 + $0x24] sm:$0xf]
        %v986 = vld [vmem:[%s9 + $0x28] sm:$0xf]
        %v987 = vld [vmem:[%s9 + $0x2c] sm:$0xf]
        %v988 = vld [vmem:[%s9 + $0x30] sm:$0xf]
        %v989 = vld [vmem:[%s9 + $0x34] sm:$0xf]
        %v990 = vld [vmem:[%s9 + $0x38] sm:$0xf]
        %v991 = vld [vmem:[%s9 + $0x3c] sm:$0xf]
        %v992 = vld [vmem:[%s10] sm:$0x1]
        %v994 = vperm.slane %v992, 0
        %v1012 = vunpack.c.l.b16 %v976
        %v1013 = vunpack.c.l.b16 %v977
        %v1014 = vunpack.c.l.b16 %v978
        %v1015 = vunpack.c.l.b16 %v979
        %v1016 = vunpack.c.l.b16 %v980
        %v1017 = vunpack.c.l.b16 %v981
        %v1018 = vunpack.c.l.b16 %v982
        %v1019 = vunpack.c.l.b16 %v983
        %v1020 = vunpack.c.l.b16 %v984
        %v1021 = vunpack.c.l.b16 %v985
        %v1022 = vunpack.c.l.b16 %v986
        %v1023 = vunpack.c.l.b16 %v987
        %v1024 = vunpack.c.l.b16 %v988
        %v1025 = vunpack.c.l.b16 %v989
        %v1026 = vunpack.c.l.b16 %v990
        %v1027 = vunpack.c.l.b16 %v991
        %v1028 = vpack.c.b16 %v1013, %v1012
        %v1029 = vpack.c.b16 %v1015, %v1014
        %v1030 = vpack.c.b16 %v1017, %v1016
        %v1031 = vpack.c.b16 %v1019, %v1018
        %v1032 = vpack.c.b16 %v1021, %v1020
        %v1033 = vpack.c.b16 %v1023, %v1022
        %v1034 = vpack.c.b16 %v1025, %v1024
        %v1035 = vpack.c.b16 %v1027, %v1026
        %1044 = vmatpush.bf16.msra.mxu0 %v1035
        %1045 = vmatpush.bf16.msra.mxu0 %v1034
        %1046 = vmatpush.bf16.msra.mxu0 %v1033
        %1047 = vmatpush.bf16.msra.mxu0 %v1032
        %1048 = vmatpush.bf16.msra.mxu0 %v1031
        %1049 = vmatpush.bf16.msra.mxu0 %v1030
        %1050 = vmatpush.bf16.msra.mxu0 %v1029
        %1051 = vmatpush.bf16.msra.mxu0 %v1028
        %1052 = vmatmul.bf16.gmra.mxu0 %v968
        %v1053 = vpop.f32.mrf.mxu0
        %v1054 = vadd.f32 %v994, %v1053
        %v1055 = vpop.f32.mrf.mxu0
        %v1056 = vadd.f32 %v994, %v1055
        %1057 = vmatmul.bf16.gmra.mxu0 %v969
        %v1058 = vpop.f32.mrf.mxu0
        %v1059 = vadd.f32 %v994, %v1058
        %v1060 = vpop.f32.mrf.mxu0
        %v1061 = vadd.f32 %v994, %v1060
        %1062 = vmatmul.bf16.gmra.mxu0 %v970
        %v1063 = vpop.f32.mrf.mxu0
        %v1064 = vadd.f32 %v994, %v1063
        %v1065 = vpop.f32.mrf.mxu0
        %v1066 = vadd.f32 %v994, %v1065
        %1067 = vmatmul.bf16.gmra.mxu0 %v971
        %v1068 = vpop.f32.mrf.mxu0
        %v1069 = vadd.f32 %v994, %v1068
        %v1070 = vpop.f32.mrf.mxu0
        %v1071 = vadd.f32 %v994, %v1070
        %1072 = vmatmul.bf16.gmra.mxu0 %v972
        %v1073 = vpop.f32.mrf.mxu0
        %v1074 = vadd.f32 %v994, %v1073
        %v1075 = vpop.f32.mrf.mxu0
        %v1076 = vadd.f32 %v994, %v1075
        %1077 = vmatmul.bf16.gmra.mxu0 %v973
        %v1078 = vpop.f32.mrf.mxu0
        %v1079 = vadd.f32 %v994, %v1078
        %v1080 = vpop.f32.mrf.mxu0
        %v1081 = vadd.f32 %v994, %v1080
        %1082 = vmatmul.bf16.gmra.mxu0 %v974
        %v1083 = vpop.f32.mrf.mxu0
        %v1084 = vadd.f32 %v994, %v1083
        %v1085 = vpop.f32.mrf.mxu0
        %v1086 = vadd.f32 %v994, %v1085
        %1087 = vmatmul.bf16.gmra.mxu0 %v975
        %v1088 = vpop.f32.mrf.mxu0
        %v1089 = vadd.f32 %v994, %v1088
        %v1090 = vpop.f32.mrf.mxu0
        %v1091 = vadd.f32 %v994, %v1090
        %1092 = vdwg.mxu0
        %v1093 = vtanh.pop %v1054
        %v1094 = vtanh.pop %v1056
        %v1095 = vtanh.pop %v1059
        %v1096 = vtanh.pop %v1061
        %v1097 = vtanh.pop %v1064
        %v1098 = vtanh.pop %v1066
        %v1099 = vtanh.pop %v1069
        %v1100 = vtanh.pop %v1071
        %v1101 = vtanh.pop %v1074
        %v1102 = vtanh.pop %v1076
        %v1103 = vtanh.pop %v1079
        %v1104 = vtanh.pop %v1081
        %v1105 = vtanh.pop %v1084
        %v1106 = vtanh.pop %v1086
        %v1107 = vtanh.pop %v1089
        %v1108 = vtanh.pop %v1091
        %1109 = vst [vmem:[%s380] sm:$0xff] %v1093
        %1110 = vst [vmem:[%s380 + $0x8] sm:$0xff] %v1094
        %1111 = vst [vmem:[%s380 + $0x10] sm:$0xff] %v1095
        %1112 = vst [vmem:[%s380 + $0x18] sm:$0xff] %v1096
        %1113 = vst [vmem:[%s380 + $0x20] sm:$0xff] %v1097
        %1114 = vst [vmem:[%s380 + $0x28] sm:$0xff] %v1098
        %1115 = vst [vmem:[%s380 + $0x30] sm:$0xff] %v1099
        %1116 = vst [vmem:[%s380 + $0x38] sm:$0xff] %v1100
        %1117 = vst [vmem:[%s380 + $0x40] sm:$0xff] %v1101
        %1118 = vst [vmem:[%s380 + $0x48] sm:$0xff] %v1102
        %1119 = vst [vmem:[%s380 + $0x50] sm:$0xff] %v1103
        %1120 = vst [vmem:[%s380 + $0x58] sm:$0xff] %v1104
        %1121 = vst [vmem:[%s380 + $0x60] sm:$0xff] %v1105
        %1122 = vst [vmem:[%s380 + $0x68] sm:$0xff] %v1106
        %1123 = vst [vmem:[%s380 + $0x70] sm:$0xff] %v1107
        %1124 = vst [vmem:[%s380 + $0x78] sm:$0xff] %v1108
        %s1125 = sand.u32 %s269, 1
        %s1126 = scalar_lea.sflag [#allocation3], %s1125
        %s1127 = sand.u32 %s269, 1
        %s1128 = smul.addr %s1127, 128
        %s1129 = scalar_lea.vmem [#allocation2], %s1128
        // Predicated region
        $region65: #{autoencoder_forward.1} parent=63 // pred_check
          %p1130 = pneg %p279
        $region66: #{autoencoder_forward.1} parent=63 // pred_check_branch
          %1132 = sbr.rel (%p1130) target = $region68
        $region67: #{autoencoder_forward.1} parent=63 // pred_region
          %s1133 = smul.u32 16, %s25
          %1135 = vsyncadd %s1126, 0
          %s1136 = smul.addr %s1133, 8
          %s1137 = scalar_lea.hbm %s11, %s1136
          %s1138 = sshll.u32 %s1129, 4
          %s1139 = int_to_ptr.vmem [resolvable:$true] %s1138
          %s1140 = sshll.u32 %s1137, 4
          %s1141 = int_to_ptr.hbm [resolvable:$true] %s1140
          %1146 = dma.vmem_to_hbm [thread:$0]  %s1139, 2048, %s1141, %s1126, 128, 128, 8
        $region68: #{autoencoder_forward.1} parent=63 // pred_fallthru
          _
      $region64: #{autoencoder_forward.1} parent=5 // pred_fallthru
        _
      %p1147 = scmp.le.s32.totalorder 2, %s20
      // Predicated region
      $region69: #{autoencoder_forward.1} parent=5 // pred_check
        %p1148 = pneg %p1147
      $region70: #{autoencoder_forward.1} parent=5 // pred_check_branch
        %1150 = sbr.rel (%p1148) target = $region72
      $region71: #{autoencoder_forward.1} parent=5 // pred_region
        %s1151 = ssub.s32 %s20, 2
        // Predicated region
        $region73: #{autoencoder_forward.1} parent=71 // pred_check
          %p1152 = pneg %p285
        $region74: #{autoencoder_forward.1} parent=71 // pred_check_branch
          %1154 = sbr.rel (%p1152) target = $region76
        $region75: #{autoencoder_forward.1} parent=71 // pred_region
          %s1155 = sand.u32 %s270, 1
          %s1156 = scalar_lea.sflag [#allocation3], %s1155
          %s1157 = sand.u32 %s270, 1
          %s1158 = smul.addr %s1157, 128
          %s1159 = scalar_lea.vmem [#allocation2], %s1158
          %1161 = dma.done %s1156, 2048
        $region76: #{autoencoder_forward.1} parent=71 // pred_fallthru
          _
      $region72: #{autoencoder_forward.1} parent=5 // pred_fallthru
        _
    $region6: #{autoencoder_forward.1} parent=1 // loop_footer
      %s24 = sadd.s32 1, %s20
    $region7: #{autoencoder_forward.1} parent=1 // loop_footer_branch
      %19 = sbr.rel target = $region3
    $region8: #{autoencoder_forward.1} parent=1 // loop_exit
      _
    %1162 = vsyncpa [#allocation3], 1
    %s1163 = scalar_lea.sflag [#allocation3], 1
    %1164 = vsyncpa %s1163, 1

</llo_original>
